<compile_context>
chip_gen: v6e
topology: v6e:2x2x1
jax: 0.10.0
libtpu: 0.0.40
codegen_flags: <defaults>
</compile_context>

<pallas_src>
import functools

import jax
import jax.numpy as jnp
from jax.experimental import pallas as pl
from jax.experimental.pallas import tpu as pltpu

INPUT_SIZE = 10
HIDDEN_SIZE = 5
NUM_CLASSES = 2

PAD = 128  # lane-dense padded feature width for all layers


def _round_up(n, m):
    return ((n + m - 1) // m) * m


def _mlp_kernel(x_ref, w1_ref, w2_ref, w3_ref, b_ref, o_ref):
    # One (TB, 128) batch tile per grid step; weights/biases are VMEM-resident.
    x = x_ref[...]                                                   # (TB, 128)
    b = b_ref[...]                                                   # (8, 128)
    h1 = jnp.dot(x, w1_ref[...], preferred_element_type=jnp.float32) + b[0:1, :]
    h1 = jnp.maximum(h1, 0.0)                                        # ReLU (VPU)
    h2 = jnp.dot(h1, w2_ref[...], preferred_element_type=jnp.float32) + b[1:2, :]
    h2 = jnp.maximum(h2, 0.0)                                        # ReLU (VPU)
    out = jnp.dot(h2, w3_ref[...], preferred_element_type=jnp.float32) + b[2:3, :]
    o_ref[...] = out.astype(o_ref.dtype)                             # lane-dense store


def _pad2d(a, rows, cols):
    return jnp.pad(a, ((0, rows - a.shape[0]), (0, cols - a.shape[1])))


@functools.partial(jax.jit, static_argnames=("block_b",))
def neural_net_forward(x, params, *, block_b=512):
    """x: (B, INPUT_SIZE) float32. params: dict of w1,b1,w2,b2,w3,b3 (W as (in, out))."""
    B = x.shape[0]

    # Zero-pad all feature dims to 128 (exact math; see header comment).
    w1p = _pad2d(params["w1"], PAD, PAD)
    w2p = _pad2d(params["w2"], PAD, PAD)
    w3p = _pad2d(params["w3"], PAD, PAD)
    bp = jnp.zeros((8, PAD), jnp.float32)
    bp = bp.at[0, :HIDDEN_SIZE].set(params["b1"].reshape(-1))
    bp = bp.at[1, :HIDDEN_SIZE].set(params["b2"].reshape(-1))
    bp = bp.at[2, :NUM_CLASSES].set(params["b3"].reshape(-1))

    # Batch tile: multiple of 8 sublanes; pad B up to a whole number of tiles.
    tb = min(block_b, _round_up(B, 8))
    b_pad = _round_up(B, tb)
    xp = jnp.pad(x, ((0, b_pad - B), (0, PAD - x.shape[1])))

    out_padded = pl.pallas_call(
        _mlp_kernel,
        out_shape=jax.ShapeDtypeStruct((b_pad, PAD), jnp.float32),
        grid_spec=pltpu.PrefetchScalarGridSpec(
            num_scalar_prefetch=0,
            grid=(b_pad // tb,),
            in_specs=[
                pl.BlockSpec((tb, PAD), lambda i: (i, 0)),    # x: batch-tiled
                pl.BlockSpec((PAD, PAD), lambda i: (0, 0)),   # w1: VMEM-resident
                pl.BlockSpec((PAD, PAD), lambda i: (0, 0)),   # w2: VMEM-resident
                pl.BlockSpec((PAD, PAD), lambda i: (0, 0)),   # w3: VMEM-resident
                pl.BlockSpec((8, PAD), lambda i: (0, 0)),     # packed biases
            ],
            out_specs=pl.BlockSpec((tb, PAD), lambda i: (i, 0)),
        ),
        compiler_params=pltpu.CompilerParams(
            dimension_semantics=("parallel",),
        ),
    )(xp, w1p, w2p, w3p, bp)

    return out_padded[:B, :NUM_CLASSES]


def init_params(key):
    """Deterministic init mimicking PyTorch nn.Linear default (uniform +-1/sqrt(fan_in)).
    Weights are stored (in_features, out_features)."""
    def linear(k, fan_in, fan_out):
        kw, kb = jax.random.split(k)
        bound = 1.0 / jnp.sqrt(float(fan_in))
        w = jax.random.uniform(kw, (fan_in, fan_out), jnp.float32, -bound, bound)
        b = jax.random.uniform(kb, (1, fan_out), jnp.float32, -bound, bound)
        return w, b

    k1, k2, k3 = jax.random.split(key, 3)
    w1, b1 = linear(k1, INPUT_SIZE, HIDDEN_SIZE)
    w2, b2 = linear(k2, HIDDEN_SIZE, HIDDEN_SIZE)
    w3, b3 = linear(k3, HIDDEN_SIZE, NUM_CLASSES)
    return {"w1": w1, "b1": b1, "w2": w2, "b2": b2, "w3": w3, "b3": b3}


def _reference_forward(x, p):
    h1 = jnp.maximum(x @ p["w1"] + p["b1"], 0.0)
    h2 = jnp.maximum(h1 @ p["w2"] + p["b2"], 0.0)
    return h2 @ p["w3"] + p["b3"]


if __name__ == "__main__":
    key = jax.random.PRNGKey(0)
    k_params, k_x_small, k_x_big = jax.random.split(key, 3)
    params = init_params(k_params)

    # Small batch (single-tile grid) — always goes through the Pallas kernel.
    B = 8
    x = jax.random.normal(k_x_small, (B, INPUT_SIZE), jnp.float32)
    out = jax.block_until_ready(neural_net_forward(x, params))
    ref = _reference_forward(x, params)
    assert out.shape == (B, NUM_CLASSES)
    assert jnp.allclose(out, ref, atol=1e-5, rtol=1e-5)

    # Larger batch exercising the multi-tile, pipelined grid (4 tiles at
    # block_b=128, so both v7x TensorCores get work).
    B2 = 512
    x2 = jax.random.normal(k_x_big, (B2, INPUT_SIZE), jnp.float32)
    out2 = jax.block_until_ready(neural_net_forward(x2, params, block_b=128))
    assert out2.shape == (B2, NUM_CLASSES)
    assert jnp.allclose(out2, _reference_forward(x2, params), atol=1e-5, rtol=1e-5)

    print("KERNEL_OK")
</pallas_src>

<mosaic_0001>
module attributes {stable_mosaic.version = 11 : i64} {
  func.func @_mlp_kernel(%arg0: i32, %arg1: memref<8x128xf32, #tpu.memory_space<vmem>>, %arg2: memref<128x128xf32, #tpu.memory_space<vmem>>, %arg3: memref<128x128xf32, #tpu.memory_space<vmem>>, %arg4: memref<128x128xf32, #tpu.memory_space<vmem>>, %arg5: memref<8x128xf32, #tpu.memory_space<vmem>>, %arg6: memref<8x128xf32, #tpu.memory_space<vmem>>) attributes {dimension_semantics = [#tpu.dimension_semantics<parallel>], iteration_bounds = array<i64: 1>, scalar_prefetch = 0 : i64, scratch_operands = 0 : i64, tpu.core_type = #tpu.core_type<tc>, window_params = [{transform_indices = @transform_0, window_bounds = array<i64: 8, 128>}, {pipeline_mode = #tpu.pipeline_mode<synchronous>, transform_indices = @transform_1, window_bounds = array<i64: 128, 128>}, {pipeline_mode = #tpu.pipeline_mode<synchronous>, transform_indices = @transform_2, window_bounds = array<i64: 128, 128>}, {pipeline_mode = #tpu.pipeline_mode<synchronous>, transform_indices = @transform_3, window_bounds = array<i64: 128, 128>}, {pipeline_mode = #tpu.pipeline_mode<synchronous>, transform_indices = @transform_4, window_bounds = array<i64: 8, 128>}, {transform_indices = @transform_5, window_bounds = array<i64: 8, 128>}]} {
    %c0 = arith.constant 0 : index
    %c0_0 = arith.constant 0 : index
    %0 = vector.load %arg1[%c0, %c0_0] : memref<8x128xf32, #tpu.memory_space<vmem>>, vector<8x128xf32>
    %c0_1 = arith.constant 0 : index
    %c0_2 = arith.constant 0 : index
    %1 = vector.load %arg5[%c0_1, %c0_2] : memref<8x128xf32, #tpu.memory_space<vmem>>, vector<8x128xf32>
    %c0_3 = arith.constant 0 : index
    %c0_4 = arith.constant 0 : index
    %2 = vector.load %arg2[%c0_3, %c0_4] : memref<128x128xf32, #tpu.memory_space<vmem>>, vector<128x128xf32>
    %cst = arith.constant dense<0.000000e+00> : vector<8x128xf32>
    %3 = tpu.matmul %0, %2, %cst {dimension_numbers = #tpu.dot_dimension_numbers<[1], [0], [0], [1], [0, 0, 1, 1], [], []>} : vector<8x128xf32>, vector<128x128xf32>, vector<8x128xf32> -> vector<8x128xf32>
    %4 = vector.extract_strided_slice %1 {offsets = [0, 0], sizes = [1, 128], strides = [1, 1]} : vector<8x128xf32> to vector<1x128xf32>
    %5 = vector.broadcast %4 : vector<1x128xf32> to vector<8x128xf32>
    %6 = arith.addf %3, %5 : vector<8x128xf32>
    %cst_5 = arith.constant 0.000000e+00 : f32
    %7 = vector.broadcast %cst_5 : f32 to vector<8x128xf32>
    %8 = arith.maximumf %6, %7 : vector<8x128xf32>
    %c0_6 = arith.constant 0 : index
    %c0_7 = arith.constant 0 : index
    %9 = vector.load %arg3[%c0_6, %c0_7] : memref<128x128xf32, #tpu.memory_space<vmem>>, vector<128x128xf32>
    %cst_8 = arith.constant dense<0.000000e+00> : vector<8x128xf32>
    %10 = tpu.matmul %8, %9, %cst_8 {dimension_numbers = #tpu.dot_dimension_numbers<[1], [0], [0], [1], [0, 0, 1, 1], [], []>} : vector<8x128xf32>, vector<128x128xf32>, vector<8x128xf32> -> vector<8x128xf32>
    %11 = vector.extract_strided_slice %1 {offsets = [1, 0], sizes = [1, 128], strides = [1, 1]} : vector<8x128xf32> to vector<1x128xf32>
    %12 = vector.broadcast %11 : vector<1x128xf32> to vector<8x128xf32>
    %13 = arith.addf %10, %12 : vector<8x128xf32>
    %cst_9 = arith.constant 0.000000e+00 : f32
    %14 = vector.broadcast %cst_9 : f32 to vector<8x128xf32>
    %15 = arith.maximumf %13, %14 : vector<8x128xf32>
    %c0_10 = arith.constant 0 : index
    %c0_11 = arith.constant 0 : index
    %16 = vector.load %arg4[%c0_10, %c0_11] : memref<128x128xf32, #tpu.memory_space<vmem>>, vector<128x128xf32>
    %cst_12 = arith.constant dense<0.000000e+00> : vector<8x128xf32>
    %17 = tpu.matmul %15, %16, %cst_12 {dimension_numbers = #tpu.dot_dimension_numbers<[1], [0], [0], [1], [0, 0, 1, 1], [], []>} : vector<8x128xf32>, vector<128x128xf32>, vector<8x128xf32> -> vector<8x128xf32>
    %18 = vector.extract_strided_slice %1 {offsets = [2, 0], sizes = [1, 128], strides = [1, 1]} : vector<8x128xf32> to vector<1x128xf32>
    %19 = vector.broadcast %18 : vector<1x128xf32> to vector<8x128xf32>
    %20 = arith.addf %17, %19 : vector<8x128xf32>
    %c0_13 = arith.constant 0 : index
    %c0_14 = arith.constant 0 : index
    %21 = vector.load %arg6[%c0_13, %c0_14] : memref<8x128xf32, #tpu.memory_space<vmem>>, vector<8x128xf32>
    tpu.vector_store %arg6[%c0_13, %c0_14], %20 {strides = array<i32>} : memref<8x128xf32, #tpu.memory_space<vmem>>, vector<8x128xf32>,
    return
  }
  func.func @transform_0(%arg0: i32) -> (i32, i32) {
    %c0_i32 = arith.constant 0 : i32
    %c0_i32_0 = arith.constant 0 : i32
    return %arg0, %c0_i32 : i32, i32
  }
  func.func @transform_1(%arg0: i32) -> (i32, i32) {
    %c0_i32 = arith.constant 0 : i32
    %c0_i32_0 = arith.constant 0 : i32
    %c0_i32_1 = arith.constant 0 : i32
    return %c0_i32, %c0_i32_0 : i32, i32
  }
  func.func @transform_2(%arg0: i32) -> (i32, i32) {
    %c0_i32 = arith.constant 0 : i32
    %c0_i32_0 = arith.constant 0 : i32
    %c0_i32_1 = arith.constant 0 : i32
    return %c0_i32, %c0_i32_0 : i32, i32
  }
  func.func @transform_3(%arg0: i32) -> (i32, i32) {
    %c0_i32 = arith.constant 0 : i32
    %c0_i32_0 = arith.constant 0 : i32
    %c0_i32_1 = arith.constant 0 : i32
    return %c0_i32, %c0_i32_0 : i32, i32
  }
  func.func @transform_4(%arg0: i32) -> (i32, i32) {
    %c0_i32 = arith.constant 0 : i32
    %c0_i32_0 = arith.constant 0 : i32
    %c0_i32_1 = arith.constant 0 : i32
    return %c0_i32, %c0_i32_0 : i32, i32
  }
  func.func @transform_5(%arg0: i32) -> (i32, i32) {
    %c0_i32 = arith.constant 0 : i32
    %c0_i32_0 = arith.constant 0 : i32
    return %arg0, %c0_i32 : i32, i32
  }
}

</mosaic_0001>

<llo_original>
// kernel: neural_net_forward.1
$region0: #{neural_net_forward.1}
  #allocation0 [shape = 'u32[]', space=smem, size = 0x4, offset = 0x4, fixed_abs, tag = 'smem constant byte address 0x4 - core index']
  #allocation1 [shape = 'u32[144,128]{1,0:T(1,128)}', space=vmem, size = 0x12000, scoped, tag = 'internal scratch']
  %s0 = inlined_call_operand.vmem [shape: f32[8,128], index: 0, kind: input, shape index: {}]
  %s1 = inlined_call_operand.vmem [shape: f32[128,128], index: 1, kind: input, shape index: {}]
  %s2 = inlined_call_operand.vmem [shape: f32[128,128], index: 2, kind: input, shape index: {}]
  %s3 = inlined_call_operand.vmem [shape: f32[128,128], index: 3, kind: input, shape index: {}]
  %s4 = inlined_call_operand.vmem [shape: f32[8,128], index: 4, kind: input, shape index: {}]
  %s5 = inlined_call_operand.vmem [shape: f32[8,128], index: 5, kind: output, shape index: {}]
  %s6 = sld [smem:[#allocation0]]
  $region30: #{neural_net_forward.1} parent=0
    _
  %s8 = ssub.s32 1, %s6
  %s9 = scalar_select 0, %s8, %s6
  // Predicated region
  $region2: #{neural_net_forward.1} parent=0 // pred_check
    _
  $region3: #{neural_net_forward.1} parent=0 // pred_check_branch
    %11 = sbr.rel (0) target = $region5
  $region4: #{neural_net_forward.1} parent=0 // pred_region
    _
  $region5: #{neural_net_forward.1} parent=0 // pred_fallthru
    _
  // Predicated region
  $region6: #{neural_net_forward.1} parent=0 // pred_check
    _
  $region7: #{neural_net_forward.1} parent=0 // pred_check_branch
    %13 = sbr.rel (0) target = $region9
  $region8: #{neural_net_forward.1} parent=0 // pred_region
    _
  $region9: #{neural_net_forward.1} parent=0 // pred_fallthru
    _
  // Predicated region
  $region10: #{neural_net_forward.1} parent=0 // pred_check
    _
  $region11: #{neural_net_forward.1} parent=0 // pred_check_branch
    %15 = sbr.rel (0) target = $region13
  $region12: #{neural_net_forward.1} parent=0 // pred_region
    _
  $region13: #{neural_net_forward.1} parent=0 // pred_fallthru
    _
  // Predicated region
  $region14: #{neural_net_forward.1} parent=0 // pred_check
    _
  $region15: #{neural_net_forward.1} parent=0 // pred_check_branch
    %17 = sbr.rel (0) target = $region17
  $region16: #{neural_net_forward.1} parent=0 // pred_region
    _
  $region17: #{neural_net_forward.1} parent=0 // pred_fallthru
    _
  // Predicated region
  $region18: #{neural_net_forward.1} parent=0 // pred_check
    _
  $region19: #{neural_net_forward.1} parent=0 // pred_check_branch
    %19 = sbr.rel (0) target = $region21
  $region20: #{neural_net_forward.1} parent=0 // pred_region
    _
  $region21: #{neural_net_forward.1} parent=0 // pred_fallthru
    _
  %v20 = vld [vmem:[%s0] sm:$0xff]
  %v21 = vld [vmem:[%s4] sm:$0xff]
  %v22 = vld [vmem:[%s1] sm:$0xff]
  %v23 = vld [vmem:[%s1 + $0x8] sm:$0xff]
  %v24 = vld [vmem:[%s1 + $0x10] sm:$0xff]
  %v25 = vld [vmem:[%s1 + $0x18] sm:$0xff]
  %v26 = vld [vmem:[%s1 + $0x20] sm:$0xff]
  %v27 = vld [vmem:[%s1 + $0x28] sm:$0xff]
  %v28 = vld [vmem:[%s1 + $0x30] sm:$0xff]
  %v29 = vld [vmem:[%s1 + $0x38] sm:$0xff]
  %v30 = vld [vmem:[%s1 + $0x40] sm:$0xff]
  %v31 = vld [vmem:[%s1 + $0x48] sm:$0xff]
  %v32 = vld [vmem:[%s1 + $0x50] sm:$0xff]
  %v33 = vld [vmem:[%s1 + $0x58] sm:$0xff]
  %v34 = vld [vmem:[%s1 + $0x60] sm:$0xff]
  %v35 = vld [vmem:[%s1 + $0x68] sm:$0xff]
  %v36 = vld [vmem:[%s1 + $0x70] sm:$0xff]
  %v37 = vld [vmem:[%s1 + $0x78] sm:$0xff]
  %v38 = vlaneseq
  %v39 = vshrl.u32 %v38, 7
  %v40 = vsub.s32 0, %v39
  %v41 = vrot.slane %v21, %v40
  %42 = vmatprep.subr.mxu0 0.0
  %43 = vmatpush1.msra.mxu0 %v37
  %44 = vmatprep.subr.mxu0 0.0
  %45 = vmatpush1.msra.mxu0 %v36
  %46 = vmatprep.subr.mxu0 0.0
  %47 = vmatpush1.msra.mxu0 %v35
  %48 = vmatprep.subr.mxu0 0.0
  %49 = vmatpush1.msra.mxu0 %v34
  %50 = vmatprep.subr.mxu0 0.0
  %51 = vmatpush1.msra.mxu0 %v33
  %52 = vmatprep.subr.mxu0 0.0
  %53 = vmatpush1.msra.mxu0 %v32
  %54 = vmatprep.subr.mxu0 0.0
  %55 = vmatpush1.msra.mxu0 %v31
  %56 = vmatprep.subr.mxu0 0.0
  %57 = vmatpush1.msra.mxu0 %v30
  %58 = vmatprep.subr.mxu0 0.0
  %59 = vmatpush1.msra.mxu0 %v29
  %60 = vmatprep.subr.mxu0 0.0
  %61 = vmatpush1.msra.mxu0 %v28
  %62 = vmatprep.subr.mxu0 0.0
  %63 = vmatpush1.msra.mxu0 %v27
  %64 = vmatprep.subr.mxu0 0.0
  %65 = vmatpush1.msra.mxu0 %v26
  %66 = vmatprep.subr.mxu0 0.0
  %67 = vmatpush1.msra.mxu0 %v25
  %68 = vmatprep.subr.mxu0 0.0
  %69 = vmatpush1.msra.mxu0 %v24
  %70 = vmatprep.subr.mxu0 0.0
  %71 = vmatpush1.msra.mxu0 %v23
  %72 = vmatprep.subr.mxu0 0.0
  %73 = vmatpush1.msra.mxu0 %v22
  %74 = vmatprep.subr.mxu0 0.0
  %75 = vmatpush2.msra.mxu0 0.0
  %76 = vmatprep.subr.mxu0 0.0
  %77 = vmatpush2.msra.mxu0 0.0
  %78 = vmatprep.subr.mxu0 0.0
  %79 = vmatpush2.msra.mxu0 0.0
  %80 = vmatprep.subr.mxu0 0.0
  %81 = vmatpush2.msra.mxu0 0.0
  %82 = vmatprep.subr.mxu0 0.0
  %83 = vmatpush2.msra.mxu0 0.0
  %84 = vmatprep.subr.mxu0 0.0
  %85 = vmatpush2.msra.mxu0 0.0
  %86 = vmatprep.subr.mxu0 0.0
  %87 = vmatpush2.msra.mxu0 0.0
  %88 = vmatprep.subr.mxu0 0.0
  %89 = vmatpush2.msra.mxu0 0.0
  %90 = vmatprep.subr.mxu0 0.0
  %91 = vmatpush2.msra.mxu0 0.0
  %92 = vmatprep.subr.mxu0 0.0
  %93 = vmatpush2.msra.mxu0 0.0
  %94 = vmatprep.subr.mxu0 0.0
  %95 = vmatpush2.msra.mxu0 0.0
  %96 = vmatprep.subr.mxu0 0.0
  %97 = vmatpush2.msra.mxu0 0.0
  %98 = vmatprep.subr.mxu0 0.0
  %99 = vmatpush2.msra.mxu0 0.0
  %100 = vmatprep.subr.mxu0 0.0
  %101 = vmatpush2.msra.mxu0 0.0
  %102 = vmatprep.subr.mxu0 0.0
  %103 = vmatpush2.msra.mxu0 0.0
  %104 = vmatprep.subr.mxu0 0.0
  %105 = vmatpush2.msra.mxu0 0.0
  %106 = vmatprep.mubr.f32.mxu0 0.0
  %107 = vmatmul.mubr.f32.gmra.mxu0 %v20
  %v108 = vpop.f32.mrf.mxu0
  %v109 = vadd.f32 %v41, %v108
  %v110 = vpop.f32.mrf.mxu0
  %111 = vdwg.mxu0
  %v112 = vmax.f32 %v109, 0.0
  %v113 = vld [vmem:[%s2] sm:$0xff]
  %v114 = vld [vmem:[%s2 + $0x8] sm:$0xff]
  %v115 = vld [vmem:[%s2 + $0x10] sm:$0xff]
  %v116 = vld [vmem:[%s2 + $0x18] sm:$0xff]
  %v117 = vld [vmem:[%s2 + $0x20] sm:$0xff]
  %v118 = vld [vmem:[%s2 + $0x28] sm:$0xff]
  %v119 = vld [vmem:[%s2 + $0x30] sm:$0xff]
  %v120 = vld [vmem:[%s2 + $0x38] sm:$0xff]
  %v121 = vld [vmem:[%s2 + $0x40] sm:$0xff]
  %v122 = vld [vmem:[%s2 + $0x48] sm:$0xff]
  %v123 = vld [vmem:[%s2 + $0x50] sm:$0xff]
  %v124 = vld [vmem:[%s2 + $0x58] sm:$0xff]
  %v125 = vld [vmem:[%s2 + $0x60] sm:$0xff]
  %v126 = vld [vmem:[%s2 + $0x68] sm:$0xff]
  %v127 = vld [vmem:[%s2 + $0x70] sm:$0xff]
  %v128 = vld [vmem:[%s2 + $0x78] sm:$0xff]
  %v129 = vlaneseq
  %v130 = vshrl.u32 %v129, 7
  %v131 = vsub.s32 1, %v130
  %v132 = vrot.slane %v21, %v131
  %133 = vmatprep.subr.mxu0 0.0
  %134 = vmatpush1.msra.mxu0 %v128
  %135 = vmatprep.subr.mxu0 0.0
  %136 = vmatpush1.msra.mxu0 %v127
  %137 = vmatprep.subr.mxu0 0.0
  %138 = vmatpush1.msra.mxu0 %v126
  %139 = vmatprep.subr.mxu0 0.0
  %140 = vmatpush1.msra.mxu0 %v125
  %141 = vmatprep.subr.mxu0 0.0
  %142 = vmatpush1.msra.mxu0 %v124
  %143 = vmatprep.subr.mxu0 0.0
  %144 = vmatpush1.msra.mxu0 %v123
  %145 = vmatprep.subr.mxu0 0.0
  %146 = vmatpush1.msra.mxu0 %v122
  %147 = vmatprep.subr.mxu0 0.0
  %148 = vmatpush1.msra.mxu0 %v121
  %149 = vmatprep.subr.mxu0 0.0
  %150 = vmatpush1.msra.mxu0 %v120
  %151 = vmatprep.subr.mxu0 0.0
  %152 = vmatpush1.msra.mxu0 %v119
  %153 = vmatprep.subr.mxu0 0.0
  %154 = vmatpush1.msra.mxu0 %v118
  %155 = vmatprep.subr.mxu0 0.0
  %156 = vmatpush1.msra.mxu0 %v117
  %157 = vmatprep.subr.mxu0 0.0
  %158 = vmatpush1.msra.mxu0 %v116
  %159 = vmatprep.subr.mxu0 0.0
  %160 = vmatpush1.msra.mxu0 %v115
  %161 = vmatprep.subr.mxu0 0.0
  %162 = vmatpush1.msra.mxu0 %v114
  %163 = vmatprep.subr.mxu0 0.0
  %164 = vmatpush1.msra.mxu0 %v113
  %165 = vmatprep.subr.mxu0 0.0
  %166 = vmatpush2.msra.mxu0 0.0
  %167 = vmatprep.subr.mxu0 0.0
  %168 = vmatpush2.msra.mxu0 0.0
  %169 = vmatprep.subr.mxu0 0.0
  %170 = vmatpush2.msra.mxu0 0.0
  %171 = vmatprep.subr.mxu0 0.0
  %172 = vmatpush2.msra.mxu0 0.0
  %173 = vmatprep.subr.mxu0 0.0
  %174 = vmatpush2.msra.mxu0 0.0
  %175 = vmatprep.subr.mxu0 0.0
  %176 = vmatpush2.msra.mxu0 0.0
  %177 = vmatprep.subr.mxu0 0.0
  %178 = vmatpush2.msra.mxu0 0.0
  %179 = vmatprep.subr.mxu0 0.0
  %180 = vmatpush2.msra.mxu0 0.0
  %181 = vmatprep.subr.mxu0 0.0
  %182 = vmatpush2.msra.mxu0 0.0
  %183 = vmatprep.subr.mxu0 0.0
  %184 = vmatpush2.msra.mxu0 0.0
  %185 = vmatprep.subr.mxu0 0.0
  %186 = vmatpush2.msra.mxu0 0.0
  %187 = vmatprep.subr.mxu0 0.0
  %188 = vmatpush2.msra.mxu0 0.0
  %189 = vmatprep.subr.mxu0 0.0
  %190 = vmatpush2.msra.mxu0 0.0
  %191 = vmatprep.subr.mxu0 0.0
  %192 = vmatpush2.msra.mxu0 0.0
  %193 = vmatprep.subr.mxu0 0.0
  %194 = vmatpush2.msra.mxu0 0.0
  %195 = vmatprep.subr.mxu0 0.0
  %196 = vmatpush2.msra.mxu0 0.0
  %197 = vmatprep.mubr.f32.mxu0 0.0
  %198 = vmatmul.mubr.f32.gmra.mxu0 %v112
  %v199 = vpop.f32.mrf.mxu0
  %v200 = vadd.f32 %v132, %v199
  %v201 = vpop.f32.mrf.mxu0
  %202 = vdwg.mxu0
  %v203 = vmax.f32 %v200, 0.0
  %v204 = vld [vmem:[%s3] sm:$0xff]
  %v205 = vld [vmem:[%s3 + $0x8] sm:$0xff]
  %v206 = vld [vmem:[%s3 + $0x10] sm:$0xff]
  %v207 = vld [vmem:[%s3 + $0x18] sm:$0xff]
  %v208 = vld [vmem:[%s3 + $0x20] sm:$0xff]
  %v209 = vld [vmem:[%s3 + $0x28] sm:$0xff]
  %v210 = vld [vmem:[%s3 + $0x30] sm:$0xff]
  %v211 = vld [vmem:[%s3 + $0x38] sm:$0xff]
  %v212 = vld [vmem:[%s3 + $0x40] sm:$0xff]
  %v213 = vld [vmem:[%s3 + $0x48] sm:$0xff]
  %v214 = vld [vmem:[%s3 + $0x50] sm:$0xff]
  %v215 = vld [vmem:[%s3 + $0x58] sm:$0xff]
  %v216 = vld [vmem:[%s3 + $0x60] sm:$0xff]
  %v217 = vld [vmem:[%s3 + $0x68] sm:$0xff]
  %v218 = vld [vmem:[%s3 + $0x70] sm:$0xff]
  %v219 = vld [vmem:[%s3 + $0x78] sm:$0xff]
  %v220 = vlaneseq
  %v221 = vshrl.u32 %v220, 7
  %v222 = vsub.s32 2, %v221
  %v223 = vrot.slane %v21, %v222
  %224 = vmatprep.subr.mxu0 0.0
  %225 = vmatpush1.msra.mxu0 %v219
  %226 = vmatprep.subr.mxu0 0.0
  %227 = vmatpush1.msra.mxu0 %v218
  %228 = vmatprep.subr.mxu0 0.0
  %229 = vmatpush1.msra.mxu0 %v217
  %230 = vmatprep.subr.mxu0 0.0
  %231 = vmatpush1.msra.mxu0 %v216
  %232 = vmatprep.subr.mxu0 0.0
  %233 = vmatpush1.msra.mxu0 %v215
  %234 = vmatprep.subr.mxu0 0.0
  %235 = vmatpush1.msra.mxu0 %v214
  %236 = vmatprep.subr.mxu0 0.0
  %237 = vmatpush1.msra.mxu0 %v213
  %238 = vmatprep.subr.mxu0 0.0
  %239 = vmatpush1.msra.mxu0 %v212
  %240 = vmatprep.subr.mxu0 0.0
  %241 = vmatpush1.msra.mxu0 %v211
  %242 = vmatprep.subr.mxu0 0.0
  %243 = vmatpush1.msra.mxu0 %v210
  %244 = vmatprep.subr.mxu0 0.0
  %245 = vmatpush1.msra.mxu0 %v209
  %246 = vmatprep.subr.mxu0 0.0
  %247 = vmatpush1.msra.mxu0 %v208
  %248 = vmatprep.subr.mxu0 0.0
  %249 = vmatpush1.msra.mxu0 %v207
  %250 = vmatprep.subr.mxu0 0.0
  %251 = vmatpush1.msra.mxu0 %v206
  %252 = vmatprep.subr.mxu0 0.0
  %253 = vmatpush1.msra.mxu0 %v205
  %254 = vmatprep.subr.mxu0 0.0
  %255 = vmatpush1.msra.mxu0 %v204
  %256 = vmatprep.subr.mxu0 0.0
  %257 = vmatpush2.msra.mxu0 0.0
  %258 = vmatprep.subr.mxu0 0.0
  %259 = vmatpush2.msra.mxu0 0.0
  %260 = vmatprep.subr.mxu0 0.0
  %261 = vmatpush2.msra.mxu0 0.0
  %262 = vmatprep.subr.mxu0 0.0
  %263 = vmatpush2.msra.mxu0 0.0
  %264 = vmatprep.subr.mxu0 0.0
  %265 = vmatpush2.msra.mxu0 0.0
  %266 = vmatprep.subr.mxu0 0.0
  %267 = vmatpush2.msra.mxu0 0.0
  %268 = vmatprep.subr.mxu0 0.0
  %269 = vmatpush2.msra.mxu0 0.0
  %270 = vmatprep.subr.mxu0 0.0
  %271 = vmatpush2.msra.mxu0 0.0
  %272 = vmatprep.subr.mxu0 0.0
  %273 = vmatpush2.msra.mxu0 0.0
  %274 = vmatprep.subr.mxu0 0.0
  %275 = vmatpush2.msra.mxu0 0.0
  %276 = vmatprep.subr.mxu0 0.0
  %277 = vmatpush2.msra.mxu0 0.0
  %278 = vmatprep.subr.mxu0 0.0
  %279 = vmatpush2.msra.mxu0 0.0
  %280 = vmatprep.subr.mxu0 0.0
  %281 = vmatpush2.msra.mxu0 0.0
  %282 = vmatprep.subr.mxu0 0.0
  %283 = vmatpush2.msra.mxu0 0.0
  %284 = vmatprep.subr.mxu0 0.0
  %285 = vmatpush2.msra.mxu0 0.0
  %286 = vmatprep.subr.mxu0 0.0
  %287 = vmatpush2.msra.mxu0 0.0
  %288 = vmatprep.mubr.f32.mxu0 0.0
  %289 = vmatmul.mubr.f32.gmra.mxu0 %v203
  %v290 = vpop.f32.mrf.mxu0
  %v291 = vadd.f32 %v223, %v290
  %v292 = vpop.f32.mrf.mxu0
  %293 = vdwg.mxu0
  %294 = vst [vmem:[%s5] sm:$0xff] %v291
  // Predicated region
  $region22: #{neural_net_forward.1} parent=0 // pred_check
    _
  $region23: #{neural_net_forward.1} parent=0 // pred_check_branch
    %296 = sbr.rel (0) target = $region25
  $region24: #{neural_net_forward.1} parent=0 // pred_region
    _
  $region25: #{neural_net_forward.1} parent=0 // pred_fallthru
    _
  // Predicated region
  $region26: #{neural_net_forward.1} parent=0 // pred_check
    _
  $region27: #{neural_net_forward.1} parent=0 // pred_check_branch
    %298 = sbr.rel (0) target = $region29
  $region28: #{neural_net_forward.1} parent=0 // pred_region
    _
  $region29: #{neural_net_forward.1} parent=0 // pred_fallthru
    _

</llo_original>
